<compile_context>
chip_gen: v7x
topology: tpu7x:2x2x1
jax: 0.10.0
libtpu: 0.0.40
codegen_flags: <defaults>
</compile_context>

<pallas_src>
import math

import jax
import jax.numpy as jnp
from jax.experimental import pallas as pl
from jax.experimental.pallas import tpu as pltpu


_LANE_CANDIDATES = (1024, 512, 256, 128)   # lane-dense output widths (multiples of 128)
_SUBLANE = 8
_DEFAULT_BLOCK_BYTES = 2 << 20             # ~2 MiB per operand block (85%+ of HBM roofline)
_VMEM_SOFT_LIMIT = 24 << 20                # stay under the 32 MiB scoped-VMEM default (v7x-safe)
_MIN_PALLAS_ELEMS = 2048                   # below this, plain XLA elementwise wins


# ----------------------------------------------------------------------------- kernels

def _sampler_prng_kernel(seed_ref, mean_ref, logvar_ref, out_ref):
    # Independent noise stream per grid step (and hence per TensorCore when the
    # row-tile axis is sharded across v7x megacores): salt the seed with the
    # program id, which is unique per tile within this call.
    pltpu.prng_seed(seed_ref[0] + pl.program_id(0))
    mean = mean_ref[...].astype(jnp.float32)
    logvar = logvar_ref[...].astype(jnp.float32)
    eps = pltpu.stateful_normal(mean.shape, jnp.float32)        # rides in idle EUP/VPU slots
    std = jnp.exp(0.5 * logvar)                                  # EUP
    out_ref[...] = (mean + eps * std).astype(out_ref.dtype)      # VPU FMA + single cast


def _sampler_eps_kernel(mean_ref, logvar_ref, eps_ref, out_ref):
    # Fallback / deterministic path: eps streamed from HBM.
    mean = mean_ref[...].astype(jnp.float32)
    logvar = logvar_ref[...].astype(jnp.float32)
    eps = eps_ref[...].astype(jnp.float32)
    std = jnp.exp(0.5 * logvar)
    out_ref[...] = (mean + eps * std).astype(out_ref.dtype)


# ----------------------------------------------------------------------------- tiling

def _pick_slab(n):
    """Choose (padded_n, lane) so the slab's last dim is a large multiple of 128."""
    for min_rows in (_SUBLANE, 1):
        for lane in _LANE_CANDIDATES:
            if n % lane == 0 and n // lane >= min_rows:
                return n, lane
    # Element count not a multiple of 128: pad up to whole (8,128) f32 vregs so the
    # store stays lane-dense instead of emitting a (rows, d<128) masked block.
    n_pad = ((n + 1023) // 1024) * 1024
    for min_rows in (_SUBLANE, 1):
        for lane in _LANE_CANDIDATES:
            if n_pad % lane == 0 and n_pad // lane >= min_rows:
                return n_pad, lane
    return n_pad, 128   # unreachable (n_pad is a multiple of 1024)


def _block_rows(n_rows, lane, n_streams, itemsize, block_bytes):
    """VMEM-budgeted row-block size (multiple of 8, or the full row extent)."""
    per_block = max(lane * itemsize * _SUBLANE,
                    min(block_bytes, _VMEM_SOFT_LIMIT // (2 * n_streams)))
    tb = max(_SUBLANE, per_block // (lane * itemsize))
    tb = min(tb, n_rows)
    # Keep at least two row tiles when there is enough work so the "parallel"
    # grid axis can actually shard across both v7x TensorCores.
    if n_rows >= 2 * _SUBLANE and pl.cdiv(n_rows, tb) < 2:
        tb = pl.cdiv(n_rows, 2)
    if tb < n_rows:
        tb = max(_SUBLANE, (tb // _SUBLANE) * _SUBLANE)
    else:
        tb = n_rows
    return int(tb)


def _to_slab(x, n_pad, lane):
    flat = x.reshape(-1)
    if n_pad != flat.shape[0]:
        flat = jnp.pad(flat, (0, n_pad - flat.shape[0]))
    return flat.reshape(n_pad // lane, lane)


def _onchip_prng_available():
    if not (hasattr(pltpu, "prng_seed") and hasattr(pltpu, "stateful_normal")):
        return False
    try:
        return jax.devices()[0].platform == "tpu"
    except Exception:  # pragma: no cover
        return False


# ----------------------------------------------------------------------------- launcher

def _launch_pallas(mean2d, logvar2d, out_dtype, *, eps2d=None, seed=None,
                   block_bytes=_DEFAULT_BLOCK_BYTES):
    n_rows, lane = mean2d.shape
    n_elems = n_rows * lane
    out_itemsize = jnp.dtype(out_dtype).itemsize
    itemsize = max(jnp.dtype(mean2d.dtype).itemsize,
                   jnp.dtype(logvar2d.dtype).itemsize,
                   out_itemsize,
                   jnp.dtype(eps2d.dtype).itemsize if eps2d is not None else 0)
    n_streams = 3 if eps2d is None else 4
    tb = _block_rows(n_rows, lane, n_streams, itemsize, block_bytes)
    grid = (pl.cdiv(n_rows, tb),)

    bytes_accessed = (mean2d.size * jnp.dtype(mean2d.dtype).itemsize
                      + logvar2d.size * jnp.dtype(logvar2d.dtype).itemsize
                      + n_elems * out_itemsize)
    if eps2d is not None:
        bytes_accessed += eps2d.size * jnp.dtype(eps2d.dtype).itemsize
    cost = pl.CostEstimate(flops=2 * n_elems,
                           transcendentals=n_elems,
                           bytes_accessed=int(bytes_accessed))

    if eps2d is None:
        # Scalar-prefetched seed (SMEM) + on-chip hardware PRNG.
        spec = pl.BlockSpec((tb, lane), lambda i, seed_ref: (i, 0))
        grid_spec = pltpu.PrefetchScalarGridSpec(
            num_scalar_prefetch=1, grid=grid,
            in_specs=[spec, spec], out_specs=spec)
        kernel, args = _sampler_prng_kernel, (seed, mean2d, logvar2d)
    else:
        spec = pl.BlockSpec((tb, lane), lambda i: (i, 0))
        grid_spec = pltpu.PrefetchScalarGridSpec(
            num_scalar_prefetch=0, grid=grid,
            in_specs=[spec, spec, spec], out_specs=spec)
        kernel, args = _sampler_eps_kernel, (mean2d, logvar2d, eps2d)

    return pl.pallas_call(
        kernel,
        out_shape=jax.ShapeDtypeStruct((n_rows, lane), out_dtype),
        grid_spec=grid_spec,
        compiler_params=pltpu.CompilerParams(
            # Independent row tiles -> shard across both v7x TensorCores.
            dimension_semantics=("parallel",)),
        cost_estimate=cost,
    )(*args)


# ----------------------------------------------------------------------------- public API

def sampler(z_mean, z_log_var, key=None, *, eps=None,
            block_bytes=_DEFAULT_BLOCK_BYTES, use_onchip_prng=None):
    """z = z_mean + eps * exp(0.5 * z_log_var), eps ~ N(0, 1) (PyTorch `Sampler`).

    If `eps` is supplied it is used verbatim (deterministic / testable).  Otherwise
    noise is drawn on-chip with the TPU hardware PRNG when available, or with
    jax.random(`key`) as a fallback.
    """
    assert z_mean.shape == z_log_var.shape, "z_mean / z_log_var shape mismatch"
    if eps is None and key is None:
        raise ValueError("provide either `key` or `eps`")

    shape = z_mean.shape
    out_dtype = jnp.result_type(z_mean.dtype, z_log_var.dtype)
    n = math.prod(shape) if shape else 1

    # Tiny problems: a fused XLA elementwise op beats a one-tile pallas_call.
    if n < _MIN_PALLAS_ELEMS:
        if eps is None:
            eps = jax.random.normal(key, shape, dtype=out_dtype)
        z = (z_mean.astype(jnp.float32)
             + eps.astype(jnp.float32) * jnp.exp(0.5 * z_log_var.astype(jnp.float32)))
        return z.astype(out_dtype)

    n_pad, lane = _pick_slab(n)
    mean2d = _to_slab(z_mean, n_pad, lane)
    logvar2d = _to_slab(z_log_var, n_pad, lane)

    if eps is not None:
        out2d = _launch_pallas(mean2d, logvar2d, out_dtype,
                               eps2d=_to_slab(eps, n_pad, lane),
                               block_bytes=block_bytes)
    else:
        if use_onchip_prng is None:
            use_onchip_prng = _onchip_prng_available()
        out2d = None
        if use_onchip_prng:
            seed = jax.random.randint(key, (1,), 0, jnp.iinfo(jnp.int32).max,
                                      dtype=jnp.int32)
            try:
                out2d = _launch_pallas(mean2d, logvar2d, out_dtype, seed=seed,
                                       block_bytes=block_bytes)
            except Exception:
                # Older Mosaic without the stateful-sampling lowering: fall through
                # to the streamed-eps path rather than failing the forward pass.
                out2d = None
        if out2d is None:
            # Fallback: stream eps from HBM, generated in the output dtype so the
            # extra stream is as narrow as possible (bf16 models: 2 B/elem).
            eps2d = jax.random.normal(key, (n_pad // lane, lane), dtype=out_dtype)
            out2d = _launch_pallas(mean2d, logvar2d, out_dtype, eps2d=eps2d,
                                   block_bytes=block_bytes)

    flat = out2d.reshape(-1)
    if n_pad != n:
        flat = flat[:n]
    return flat.reshape(shape)


# ----------------------------------------------------------------------------- smoke test

if __name__ == "__main__":
    key = jax.random.PRNGKey(0)
    k_mean, k_logvar, k_eps, k_sample = jax.random.split(key, 4)

    # Small shape consistent with a VAE sampler head: (batch, latent) = (256, 128).
    b, d = 256, 128
    z_mean = jax.random.normal(k_mean, (b, d), dtype=jnp.float32)
    z_log_var = 0.1 * jax.random.normal(k_logvar, (b, d), dtype=jnp.float32)

    # 1) Deterministic check: caller-supplied eps -> bit-comparable reference.
    eps = jax.random.normal(k_eps, (b, d), dtype=jnp.float32)
    z_det = jax.block_until_ready(sampler(z_mean, z_log_var, eps=eps))
    z_ref = z_mean + eps * jnp.exp(0.5 * z_log_var)
    assert z_det.shape == (b, d) and z_det.dtype == z_mean.dtype
    assert bool(jnp.allclose(z_det, z_ref, atol=1e-5, rtol=1e-5)), "eps-path mismatch"

    # 2) On-chip PRNG path (falls back to streamed jax.random noise if unavailable):
    #    the implied noise must be ~N(0,1) and must not repeat across row tiles.
    z_rng = jax.block_until_ready(sampler(z_mean, z_log_var, key=k_sample))
    assert z_rng.shape == (b, d) and z_rng.dtype == z_mean.dtype
    assert bool(jnp.all(jnp.isfinite(z_rng)))
    implied_eps = (z_rng - z_mean) / jnp.exp(0.5 * z_log_var)
    m = float(jnp.mean(implied_eps))
    v = float(jnp.var(implied_eps))
    assert abs(m) < 0.05, f"implied eps mean {m} too far from 0"
    assert abs(v - 1.0) < 0.10, f"implied eps variance {v} too far from 1"
    half = implied_eps.reshape(-1)
    n_half = half.shape[0] // 2
    assert not bool(jnp.allclose(half[:n_half], half[n_half:])), \
        "noise repeats across row tiles (seed salting broken)"

    # 3) Padded path: latent dim not a multiple of 128 (common VAE latent sizes).
    b2, d2 = 300, 20
    zm2 = jax.random.normal(k_mean, (b2, d2), dtype=jnp.float32)
    zl2 = 0.1 * jax.random.normal(k_logvar, (b2, d2), dtype=jnp.float32)
    eps2 = jax.random.normal(k_eps, (b2, d2), dtype=jnp.float32)
    z2 = jax.block_until_ready(sampler(zm2, zl2, eps=eps2))
    z2_ref = zm2 + eps2 * jnp.exp(0.5 * zl2)
    assert z2.shape == (b2, d2) and z2.dtype == zm2.dtype
    assert bool(jnp.allclose(z2, z2_ref, atol=1e-5, rtol=1e-5)), "padded-path mismatch"

    print("KERNEL_OK")
</pallas_src>

<mosaic_0001>
module attributes {stable_mosaic.version = 11 : i64} {
  func.func @_sampler_eps_kernel(%arg0: i32, %arg1: memref<16x1024xf32, #tpu.memory_space<vmem>>, %arg2: memref<16x1024xf32, #tpu.memory_space<vmem>>, %arg3: memref<16x1024xf32, #tpu.memory_space<vmem>>, %arg4: memref<16x1024xf32, #tpu.memory_space<vmem>>) attributes {dimension_semantics = [#tpu.dimension_semantics<parallel>], iteration_bounds = array<i64: 2>, scalar_prefetch = 0 : i64, scratch_operands = 0 : i64, tpu.core_type = #tpu.core_type<tc>, window_params = [{transform_indices = @transform_0, window_bounds = array<i64: 16, 1024>}, {transform_indices = @transform_1, window_bounds = array<i64: 16, 1024>}, {transform_indices = @transform_2, window_bounds = array<i64: 16, 1024>}, {transform_indices = @transform_3, window_bounds = array<i64: 16, 1024>}]} {
    %c0 = arith.constant 0 : index
    %c0_0 = arith.constant 0 : index
    %0 = vector.load %arg1[%c0, %c0_0] : memref<16x1024xf32, #tpu.memory_space<vmem>>, vector<16x1024xf32>
    %c0_1 = arith.constant 0 : index
    %c0_2 = arith.constant 0 : index
    %1 = vector.load %arg2[%c0_1, %c0_2] : memref<16x1024xf32, #tpu.memory_space<vmem>>, vector<16x1024xf32>
    %c0_3 = arith.constant 0 : index
    %c0_4 = arith.constant 0 : index
    %2 = vector.load %arg3[%c0_3, %c0_4] : memref<16x1024xf32, #tpu.memory_space<vmem>>, vector<16x1024xf32>
    %cst = arith.constant 5.000000e-01 : f32
    %3 = vector.broadcast %cst : f32 to vector<16x1024xf32>
    %4 = arith.mulf %3, %1 : vector<16x1024xf32>
    %5 = math.exp %4 : vector<16x1024xf32>
    %6 = arith.mulf %2, %5 : vector<16x1024xf32>
    %7 = arith.addf %0, %6 : vector<16x1024xf32>
    %c0_5 = arith.constant 0 : index
    %c0_6 = arith.constant 0 : index
    %8 = vector.load %arg4[%c0_5, %c0_6] : memref<16x1024xf32, #tpu.memory_space<vmem>>, vector<16x1024xf32>
    tpu.vector_store %arg4[%c0_5, %c0_6], %7 {strides = array<i32>} : memref<16x1024xf32, #tpu.memory_space<vmem>>, vector<16x1024xf32>,
    return
  }
  func.func @transform_0(%arg0: i32) -> (i32, i32) {
    %c0_i32 = arith.constant 0 : i32
    %c0_i32_0 = arith.constant 0 : i32
    return %arg0, %c0_i32 : i32, i32
  }
  func.func @transform_1(%arg0: i32) -> (i32, i32) {
    %c0_i32 = arith.constant 0 : i32
    %c0_i32_0 = arith.constant 0 : i32
    return %arg0, %c0_i32 : i32, i32
  }
  func.func @transform_2(%arg0: i32) -> (i32, i32) {
    %c0_i32 = arith.constant 0 : i32
    %c0_i32_0 = arith.constant 0 : i32
    return %arg0, %c0_i32 : i32, i32
  }
  func.func @transform_3(%arg0: i32) -> (i32, i32) {
    %c0_i32 = arith.constant 0 : i32
    %c0_i32_0 = arith.constant 0 : i32
    return %arg0, %c0_i32 : i32, i32
  }
}

</mosaic_0001>

<llo_original>
// kernel: tpu_custom_call.1
$region0: #{tpu_custom_call.1}
  #allocation0 [shape = 'u32[]', space=smem, size = 0x4, offset = 0x4, fixed_abs, tag = 'smem constant byte address 0x4 - core index']
  #allocation1 [shape = 'u32[144,128]{1,0:T(1,128)}', space=vmem, size = 0x12000, scoped, tag = 'internal scratch']
  %s0 = inlined_call_operand.hbm [shape: f32[32,1024], index: 0, kind: input, shape index: {}]
  %s1 = inlined_call_operand.hbm [shape: f32[32,1024], index: 1, kind: input, shape index: {}]
  %s2 = inlined_call_operand.hbm [shape: f32[32,1024], index: 2, kind: input, shape index: {}]
  %s3 = inlined_call_operand.hbm [shape: f32[32,1024], index: 3, kind: output, shape index: {}]
  %s4 = sld [smem:[#allocation0]]
  $region57: #{tpu_custom_call.1} parent=0
    _
  %s6 = ssub.s32 1, %s4
  %s7 = scalar_select 0, %s6, %s4
  $region1: #{tpu_custom_call.1} parent=0
    #allocation2 [shape = 'u8[131072]{0}', space=vmem, size = 0x20000, scoped, tag = 'input window, operand 0']
    #allocation3 [shape = 's32[2]{0}', space=sflag, size = 0x8, scoped, tag = 'scoped memory for tpu_custom_call.1']
    #allocation4 [shape = 's32[2]{0}', space=sflag, size = 0x8, scoped, tag = 'scoped memory for tpu_custom_call.1']
    #allocation5 [shape = 'u8[131072]{0}', space=vmem, size = 0x20000, scoped, tag = 'input window, operand 1']
    #allocation6 [shape = 's32[2]{0}', space=sflag, size = 0x8, scoped, tag = 'scoped memory for tpu_custom_call.1']
    #allocation7 [shape = 'u8[131072]{0}', space=vmem, size = 0x20000, scoped, tag = 'input window, operand 2']
    #allocation8 [shape = 'u8[131072]{0}', space=vmem, size = 0x20000, scoped, tag = 'output window, operand 0']
    %8 = vsyncpa [#allocation3], 0
    %s9 = scalar_lea.sflag [#allocation3], 1
    %10 = vsyncpa %s9, 0
    %11 = vsyncpa [#allocation6], 0
    %s12 = scalar_lea.sflag [#allocation6], 1
    %13 = vsyncpa %s12, 0
    %14 = vsyncpa [#allocation4], 0
    %s15 = scalar_lea.sflag [#allocation4], 1
    %16 = vsyncpa %s15, 0
    loop: start=0, step=1, limit=4
    $region2: #{tpu_custom_call.1} parent=1 // loop_pre_header
      _
    $region3: #{tpu_custom_call.1} parent=1 // loop_header
      %s18 = sphi 0, %s22
      %p19 = scmp.ge.s32.totalorder %s18, 4
      %s28 = sphi 0, %s30
      %s31 = sphi 0, %s28
      %s32 = sphi 0, %s31
      %s48 = sphi 0, %s32
      %s54 = sphi 0, %s56
      %s57 = sphi 0, %s54
      %s58 = sphi 0, %s57
      %s74 = sphi 0, %s58
      %s80 = sphi 0, %s82
      %s83 = sphi 0, %s80
      %s84 = sphi 0, %s83
      %s100 = sphi 0, %s84
      %s106 = sphi 0, %s108
      %s109 = sphi 0, %s106
      %s110 = sphi 0, %s109
      %s126 = sphi 0, %s110
    $region4: #{tpu_custom_call.1} parent=1 // loop_header_branch
      %21 = sbr.rel (%p19) target = $region8
    $region5: #{tpu_custom_call.1} parent=1 // loop_body
      %s23 = ssub.s32 %s18, 1
      %s24 = ssub.s32 %s18, 2
      %s25 = sadd.s32 %s18, 1
      %s26 = ssub.s32 %s18, %s25
      %p27 = scmp.eq.s32.totalorder %s26, 0
      %s29 = sadd.s32 %s28, 1
      %s30 = scalar_select %p27, %s28, %s29
      %p33 = pneg %p27
      %p34 = scmp.eq.s32.totalorder %s18, 1
      %p35 = por %p33, %p34
      %p36 = scmp.ne.s32.totalorder %s28, %s31
      %p37 = scmp.eq.s32.totalorder %s18, 0
      %p38 = por %p36, %p37
      %p39 = scmp.ne.s32.totalorder %s28, %s31
      %p40 = scmp.eq.s32.totalorder %s23, 1
      %p41 = por %p39, %p40
      %p42 = scmp.ne.s32.totalorder %s31, %s32
      %p43 = scmp.eq.s32.totalorder %s23, 0
      %p44 = por %p42, %p43
      %p45 = scmp.ne.s32.totalorder %s31, %s32
      %p46 = scmp.eq.s32.totalorder %s24, 1
      %p47 = por %p45, %p46
      %p49 = scmp.ne.s32.totalorder %s32, %s48
      %p50 = scmp.eq.s32.totalorder %s24, 0
      %p51 = por %p49, %p50
      %s52 = ssub.s32 %s18, %s25
      %p53 = scmp.eq.s32.totalorder %s52, 0
      %s55 = sadd.s32 %s54, 1
      %s56 = scalar_select %p53, %s54, %s55
      %p59 = pneg %p53
      %p60 = scmp.eq.s32.totalorder %s18, 1
      %p61 = por %p59, %p60
      %p62 = scmp.ne.s32.totalorder %s54, %s57
      %p63 = scmp.eq.s32.totalorder %s18, 0
      %p64 = por %p62, %p63
      %p65 = scmp.ne.s32.totalorder %s54, %s57
      %p66 = scmp.eq.s32.totalorder %s23, 1
      %p67 = por %p65, %p66
      %p68 = scmp.ne.s32.totalorder %s57, %s58
      %p69 = scmp.eq.s32.totalorder %s23, 0
      %p70 = por %p68, %p69
      %p71 = scmp.ne.s32.totalorder %s57, %s58
      %p72 = scmp.eq.s32.totalorder %s24, 1
      %p73 = por %p71, %p72
      %p75 = scmp.ne.s32.totalorder %s58, %s74
      %p76 = scmp.eq.s32.totalorder %s24, 0
      %p77 = por %p75, %p76
      %s78 = ssub.s32 %s18, %s25
      %p79 = scmp.eq.s32.totalorder %s78, 0
      %s81 = sadd.s32 %s80, 1
      %s82 = scalar_select %p79, %s80, %s81
      %p85 = pneg %p79
      %p86 = scmp.eq.s32.totalorder %s18, 1
      %p87 = por %p85, %p86
      %p88 = scmp.ne.s32.totalorder %s80, %s83
      %p89 = scmp.eq.s32.totalorder %s18, 0
      %p90 = por %p88, %p89
      %p91 = scmp.ne.s32.totalorder %s80, %s83
      %p92 = scmp.eq.s32.totalorder %s23, 1
      %p93 = por %p91, %p92
      %p94 = scmp.ne.s32.totalorder %s83, %s84
      %p95 = scmp.eq.s32.totalorder %s23, 0
      %p96 = por %p94, %p95
      %p97 = scmp.ne.s32.totalorder %s83, %s84
      %p98 = scmp.eq.s32.totalorder %s24, 1
      %p99 = por %p97, %p98
      %p101 = scmp.ne.s32.totalorder %s84, %s100
      %p102 = scmp.eq.s32.totalorder %s24, 0
      %p103 = por %p101, %p102
      %s104 = ssub.s32 %s18, %s25
      %p105 = scmp.eq.s32.totalorder %s104, 0
      %s107 = sadd.s32 %s106, 1
      %s108 = scalar_select %p105, %s106, %s107
      %p111 = pneg %p105
      %p112 = scmp.eq.s32.totalorder %s18, 1
      %p113 = por %p111, %p112
      %p114 = scmp.ne.s32.totalorder %s106, %s109
      %p115 = scmp.eq.s32.totalorder %s18, 0
      %p116 = por %p114, %p115
      %p117 = scmp.ne.s32.totalorder %s106, %s109
      %p118 = scmp.eq.s32.totalorder %s23, 1
      %p119 = por %p117, %p118
      %p120 = scmp.ne.s32.totalorder %s109, %s110
      %p121 = scmp.eq.s32.totalorder %s23, 0
      %p122 = por %p120, %p121
      %p123 = scmp.ne.s32.totalorder %s109, %s110
      %p124 = scmp.eq.s32.totalorder %s24, 1
      %p125 = por %p123, %p124
      %p127 = scmp.ne.s32.totalorder %s110, %s126
      %p128 = scmp.eq.s32.totalorder %s24, 0
      %p129 = por %p127, %p128
      %p130 = scmp.le.s32.totalorder 1, %s18
      %p131 = scmp.lt.s32.totalorder %s18, 3
      %p132 = pnand %p130, %p131
      %p133 = pneg %p132
      // Predicated region
      $region9: #{tpu_custom_call.1} parent=5 // pred_check
        _
      $region10: #{tpu_custom_call.1} parent=5 // pred_check_branch
        %135 = sbr.rel (%p132) target = $region12
      $region11: #{tpu_custom_call.1} parent=5 // pred_region
        %s136 = ssub.s32 %s18, 1
      $region12: #{tpu_custom_call.1} parent=5 // pred_fallthru
        _
      %p137 = scmp.lt.s32.totalorder %s18, 2
      // Predicated region
      $region13: #{tpu_custom_call.1} parent=5 // pred_check
        %p138 = pneg %p137
      $region14: #{tpu_custom_call.1} parent=5 // pred_check_branch
        %140 = sbr.rel (%p138) target = $region16
      $region15: #{tpu_custom_call.1} parent=5 // pred_region
        // Predicated region
        $region17: #{tpu_custom_call.1} parent=15 // pred_check
          %p141 = pneg %p38
        $region18: #{tpu_custom_call.1} parent=15 // pred_check_branch
          %143 = sbr.rel (%p141) target = $region20
        $region19: #{tpu_custom_call.1} parent=15 // pred_region
          %s144 = sand.u32 %s28, 1
          %s145 = scalar_lea.sflag [#allocation3], %s144
          %s146 = sand.u32 %s28, 1
          %s147 = smul.addr %s146, 128
          %s148 = scalar_lea.vmem [#allocation2], %s147
          %s149 = smul.u32 2, %s18
          %s151 = ssub.s32 2048, 2048
          %152 = vsyncadd %s145, %s151
          %s153 = smul.addr %s149, 8
          %s154 = smul.addr %s153, 128
          %s155 = scalar_lea.hbm %s0, %s154
          %s156 = sshll.u32 %s148, 4
          %s157 = int_to_ptr.vmem [resolvable:$true] %s156
          %162 = dma.hbm_to_vmem [thread:$0]  %s155, 2048, %s157, %s145, 1024, 1024, 64
        $region20: #{tpu_custom_call.1} parent=15 // pred_fallthru
          _
        // Predicated region
        $region21: #{tpu_custom_call.1} parent=15 // pred_check
          %p163 = pneg %p64
        $region22: #{tpu_custom_call.1} parent=15 // pred_check_branch
          %165 = sbr.rel (%p163) target = $region24
        $region23: #{tpu_custom_call.1} parent=15 // pred_region
          %s166 = sand.u32 %s18, 1
          %s167 = scalar_lea.sflag [#allocation6], %s166
          %s168 = sand.u32 %s54, 1
          %s169 = smul.addr %s168, 128
          %s170 = scalar_lea.vmem [#allocation5], %s169
          %s171 = smul.u32 2, %s18
          %s173 = ssub.s32 2048, 2048
          %174 = vsyncadd %s167, %s173
          %s175 = smul.addr %s171, 8
          %s176 = smul.addr %s175, 128
          %s177 = scalar_lea.hbm %s1, %s176
          %s178 = sshll.u32 %s170, 4
          %s179 = int_to_ptr.vmem [resolvable:$true] %s178
          %184 = dma.hbm_to_vmem [thread:$0]  %s177, 2048, %s179, %s167, 1024, 1024, 64
        $region24: #{tpu_custom_call.1} parent=15 // pred_fallthru
          _
        // Predicated region
        $region25: #{tpu_custom_call.1} parent=15 // pred_check
          %p185 = pneg %p90
        $region26: #{tpu_custom_call.1} parent=15 // pred_check_branch
          %187 = sbr.rel (%p185) target = $region28
        $region27: #{tpu_custom_call.1} parent=15 // pred_region
          %s188 = sand.u32 %s18, 1
          %s189 = scalar_lea.sflag [#allocation6], %s188
          %s190 = sand.u32 %s80, 1
          %s191 = smul.addr %s190, 128
          %s192 = scalar_lea.vmem [#allocation7], %s191
          %s193 = smul.u32 2, %s18
          %s195 = ssub.s32 2048, 2048
          %196 = vsyncadd %s189, %s195
          %s197 = smul.addr %s193, 8
          %s198 = smul.addr %s197, 128
          %s199 = scalar_lea.hbm %s2, %s198
          %s200 = sshll.u32 %s192, 4
          %s201 = int_to_ptr.vmem [resolvable:$true] %s200
          %206 = dma.hbm_to_vmem [thread:$0]  %s199, 2048, %s201, %s189, 1024, 1024, 64
        $region28: #{tpu_custom_call.1} parent=15 // pred_fallthru
          _
      $region16: #{tpu_custom_call.1} parent=5 // pred_fallthru
        _
      %p207 = scmp.le.s32.totalorder 1, %s18
      %p208 = scmp.lt.s32.totalorder %s18, 3
      %p209 = pnand %p207, %p208
      %p210 = pneg %p209
      // Predicated region
      $region29: #{tpu_custom_call.1} parent=5 // pred_check
        _
      $region30: #{tpu_custom_call.1} parent=5 // pred_check_branch
        %212 = sbr.rel (%p209) target = $region32
      $region31: #{tpu_custom_call.1} parent=5 // pred_region
        %s213 = ssub.s32 %s18, 1
        %s214 = sand.u32 %s31, 1
        %s215 = scalar_lea.sflag [#allocation3], %s214
        %s216 = sand.u32 %s31, 1
        %s217 = smul.addr %s216, 128
        %s218 = scalar_lea.vmem [#allocation2], %s217
        // Predicated region
        $region33: #{tpu_custom_call.1} parent=31 // pred_check
          %p219 = pneg %p44
        $region34: #{tpu_custom_call.1} parent=31 // pred_check_branch
          %221 = sbr.rel (%p219) target = $region36
        $region35: #{tpu_custom_call.1} parent=31 // pred_region
          %222 = dma.done %s215, 2048
        $region36: #{tpu_custom_call.1} parent=31 // pred_fallthru
          _
        %s223 = sand.u32 %s23, 1
        %s224 = scalar_lea.sflag [#allocation6], %s223
        %s225 = sand.u32 %s57, 1
        %s226 = smul.addr %s225, 128
        %s227 = scalar_lea.vmem [#allocation5], %s226
        // Predicated region
        $region37: #{tpu_custom_call.1} parent=31 // pred_check
          %p228 = pneg %p70
        $region38: #{tpu_custom_call.1} parent=31 // pred_check_branch
          %230 = sbr.rel (%p228) target = $region40
        $region39: #{tpu_custom_call.1} parent=31 // pred_region
          %231 = dma.done %s224, 2048
        $region40: #{tpu_custom_call.1} parent=31 // pred_fallthru
          _
        %s232 = sand.u32 %s23, 1
        %s233 = scalar_lea.sflag [#allocation6], %s232
        %s234 = sand.u32 %s83, 1
        %s235 = smul.addr %s234, 128
        %s236 = scalar_lea.vmem [#allocation7], %s235
        // Predicated region
        $region41: #{tpu_custom_call.1} parent=31 // pred_check
          %p237 = pneg %p96
        $region42: #{tpu_custom_call.1} parent=31 // pred_check_branch
          %239 = sbr.rel (%p237) target = $region44
        $region43: #{tpu_custom_call.1} parent=31 // pred_region
          %240 = dma.done %s233, 2048
        $region44: #{tpu_custom_call.1} parent=31 // pred_fallthru
          _
        %s241 = sand.u32 %s31, 1
        %s242 = scalar_lea.sflag [#allocation3], %s241
        %s243 = sand.u32 %s31, 1
        %s244 = smul.addr %s243, 128
        %s245 = scalar_lea.vmem [#allocation2], %s244
        %p246 = pneg %p44
        %p247 = pneg %p41
        %s248 = sand.u32 %s23, 1
        %s249 = scalar_lea.sflag [#allocation6], %s248
        %s250 = sand.u32 %s57, 1
        %s251 = smul.addr %s250, 128
        %s252 = scalar_lea.vmem [#allocation5], %s251
        %p253 = pneg %p70
        %p254 = pneg %p67
        %s255 = sand.u32 %s23, 1
        %s256 = scalar_lea.sflag [#allocation6], %s255
        %s257 = sand.u32 %s83, 1
        %s258 = smul.addr %s257, 128
        %s259 = scalar_lea.vmem [#allocation7], %s258
        %p260 = pneg %p96
        %p261 = pneg %p93
        %p262 = pneg %p122
        %p263 = pneg %p119
        %s264 = sand.u32 %s109, 1
        %s265 = scalar_lea.sflag [#allocation4], %s264
        %s266 = sand.u32 %s109, 1
        %s267 = smul.addr %s266, 128
        %s268 = scalar_lea.vmem [#allocation8], %s267
        %s269 = smul.u32 2, %s23
        %s270 = smul.u32 2, %s23
        %s271 = smul.u32 2, %s23
        %s272 = smul.u32 2, %s23
        %v273 = vld [vmem:[%s218] sm:$0xff]
        %v274 = vld [vmem:[%s218 + $0x8] sm:$0xff]
        %v275 = vld [vmem:[%s218 + $0x10] sm:$0xff]
        %v276 = vld [vmem:[%s218 + $0x18] sm:$0xff]
        %v277 = vld [vmem:[%s218 + $0x20] sm:$0xff]
        %v278 = vld [vmem:[%s218 + $0x28] sm:$0xff]
        %v279 = vld [vmem:[%s218 + $0x30] sm:$0xff]
        %v280 = vld [vmem:[%s218 + $0x38] sm:$0xff]
        %v281 = vld [vmem:[%s218 + $0x40] sm:$0xff]
        %v282 = vld [vmem:[%s218 + $0x48] sm:$0xff]
        %v283 = vld [vmem:[%s218 + $0x50] sm:$0xff]
        %v284 = vld [vmem:[%s218 + $0x58] sm:$0xff]
        %v285 = vld [vmem:[%s218 + $0x60] sm:$0xff]
        %v286 = vld [vmem:[%s218 + $0x68] sm:$0xff]
        %v287 = vld [vmem:[%s218 + $0x70] sm:$0xff]
        %v288 = vld [vmem:[%s218 + $0x78] sm:$0xff]
        %v289 = vld [vmem:[%s227] sm:$0xff]
        %v290 = vld [vmem:[%s227 + $0x8] sm:$0xff]
        %v291 = vld [vmem:[%s227 + $0x10] sm:$0xff]
        %v292 = vld [vmem:[%s227 + $0x18] sm:$0xff]
        %v293 = vld [vmem:[%s227 + $0x20] sm:$0xff]
        %v294 = vld [vmem:[%s227 + $0x28] sm:$0xff]
        %v295 = vld [vmem:[%s227 + $0x30] sm:$0xff]
        %v296 = vld [vmem:[%s227 + $0x38] sm:$0xff]
        %v297 = vld [vmem:[%s227 + $0x40] sm:$0xff]
        %v298 = vld [vmem:[%s227 + $0x48] sm:$0xff]
        %v299 = vld [vmem:[%s227 + $0x50] sm:$0xff]
        %v300 = vld [vmem:[%s227 + $0x58] sm:$0xff]
        %v301 = vld [vmem:[%s227 + $0x60] sm:$0xff]
        %v302 = vld [vmem:[%s227 + $0x68] sm:$0xff]
        %v303 = vld [vmem:[%s227 + $0x70] sm:$0xff]
        %v304 = vld [vmem:[%s227 + $0x78] sm:$0xff]
        %v305 = vld [vmem:[%s236] sm:$0xff]
        %v306 = vld [vmem:[%s236 + $0x8] sm:$0xff]
        %v307 = vld [vmem:[%s236 + $0x10] sm:$0xff]
        %v308 = vld [vmem:[%s236 + $0x18] sm:$0xff]
        %v309 = vld [vmem:[%s236 + $0x20] sm:$0xff]
        %v310 = vld [vmem:[%s236 + $0x28] sm:$0xff]
        %v311 = vld [vmem:[%s236 + $0x30] sm:$0xff]
        %v312 = vld [vmem:[%s236 + $0x38] sm:$0xff]
        %v313 = vld [vmem:[%s236 + $0x40] sm:$0xff]
        %v314 = vld [vmem:[%s236 + $0x48] sm:$0xff]
        %v315 = vld [vmem:[%s236 + $0x50] sm:$0xff]
        %v316 = vld [vmem:[%s236 + $0x58] sm:$0xff]
        %v317 = vld [vmem:[%s236 + $0x60] sm:$0xff]
        %v318 = vld [vmem:[%s236 + $0x68] sm:$0xff]
        %v319 = vld [vmem:[%s236 + $0x70] sm:$0xff]
        %v320 = vld [vmem:[%s236 + $0x78] sm:$0xff]
        %v321 = vmul.f32 %v289, 0.5
        %v322 = vmul.f32 %v290, 0.5
        %v323 = vmul.f32 %v291, 0.5
        %v324 = vmul.f32 %v292, 0.5
        %v325 = vmul.f32 %v293, 0.5
        %v326 = vmul.f32 %v294, 0.5
        %v327 = vmul.f32 %v295, 0.5
        %v328 = vmul.f32 %v296, 0.5
        %v329 = vmul.f32 %v297, 0.5
        %v330 = vmul.f32 %v298, 0.5
        %v331 = vmul.f32 %v299, 0.5
        %v332 = vmul.f32 %v300, 0.5
        %v333 = vmul.f32 %v301, 0.5
        %v334 = vmul.f32 %v302, 0.5
        %v335 = vmul.f32 %v303, 0.5
        %v336 = vmul.f32 %v304, 0.5
        %v337 = vmul.f32 %v321, 1.442695
        %v338 = vpow.pop %v337
        %v339 = vmul.f32 %v322, 1.442695
        %v340 = vpow.pop %v339
        %v341 = vmul.f32 %v323, 1.442695
        %v342 = vpow.pop %v341
        %v343 = vmul.f32 %v324, 1.442695
        %v344 = vpow.pop %v343
        %v345 = vmul.f32 %v325, 1.442695
        %v346 = vpow.pop %v345
        %v347 = vmul.f32 %v326, 1.442695
        %v348 = vpow.pop %v347
        %v349 = vmul.f32 %v327, 1.442695
        %v350 = vpow.pop %v349
        %v351 = vmul.f32 %v328, 1.442695
        %v352 = vpow.pop %v351
        %v353 = vmul.f32 %v329, 1.442695
        %v354 = vpow.pop %v353
        %v355 = vmul.f32 %v330, 1.442695
        %v356 = vpow.pop %v355
        %v357 = vmul.f32 %v331, 1.442695
        %v358 = vpow.pop %v357
        %v359 = vmul.f32 %v332, 1.442695
        %v360 = vpow.pop %v359
        %v361 = vmul.f32 %v333, 1.442695
        %v362 = vpow.pop %v361
        %v363 = vmul.f32 %v334, 1.442695
        %v364 = vpow.pop %v363
        %v365 = vmul.f32 %v335, 1.442695
        %v366 = vpow.pop %v365
        %v367 = vmul.f32 %v336, 1.442695
        %v368 = vpow.pop %v367
        %v369 = vmul.f32 %v305, %v338
        %v370 = vmul.f32 %v306, %v340
        %v371 = vmul.f32 %v307, %v342
        %v372 = vmul.f32 %v308, %v344
        %v373 = vmul.f32 %v309, %v346
        %v374 = vmul.f32 %v310, %v348
        %v375 = vmul.f32 %v311, %v350
        %v376 = vmul.f32 %v312, %v352
        %v377 = vmul.f32 %v313, %v354
        %v378 = vmul.f32 %v314, %v356
        %v379 = vmul.f32 %v315, %v358
        %v380 = vmul.f32 %v316, %v360
        %v381 = vmul.f32 %v317, %v362
        %v382 = vmul.f32 %v318, %v364
        %v383 = vmul.f32 %v319, %v366
        %v384 = vmul.f32 %v320, %v368
        %v385 = vadd.f32 %v273, %v369
        %v386 = vadd.f32 %v274, %v370
        %v387 = vadd.f32 %v275, %v371
        %v388 = vadd.f32 %v276, %v372
        %v389 = vadd.f32 %v277, %v373
        %v390 = vadd.f32 %v278, %v374
        %v391 = vadd.f32 %v279, %v375
        %v392 = vadd.f32 %v280, %v376
        %v393 = vadd.f32 %v281, %v377
        %v394 = vadd.f32 %v282, %v378
        %v395 = vadd.f32 %v283, %v379
        %v396 = vadd.f32 %v284, %v380
        %v397 = vadd.f32 %v285, %v381
        %v398 = vadd.f32 %v286, %v382
        %v399 = vadd.f32 %v287, %v383
        %v400 = vadd.f32 %v288, %v384
        %401 = vst [vmem:[%s268] sm:$0xff] %v385
        %402 = vst [vmem:[%s268 + $0x8] sm:$0xff] %v386
        %403 = vst [vmem:[%s268 + $0x10] sm:$0xff] %v387
        %404 = vst [vmem:[%s268 + $0x18] sm:$0xff] %v388
        %405 = vst [vmem:[%s268 + $0x20] sm:$0xff] %v389
        %406 = vst [vmem:[%s268 + $0x28] sm:$0xff] %v390
        %407 = vst [vmem:[%s268 + $0x30] sm:$0xff] %v391
        %408 = vst [vmem:[%s268 + $0x38] sm:$0xff] %v392
        %409 = vst [vmem:[%s268 + $0x40] sm:$0xff] %v393
        %410 = vst [vmem:[%s268 + $0x48] sm:$0xff] %v394
        %411 = vst [vmem:[%s268 + $0x50] sm:$0xff] %v395
        %412 = vst [vmem:[%s268 + $0x58] sm:$0xff] %v396
        %413 = vst [vmem:[%s268 + $0x60] sm:$0xff] %v397
        %414 = vst [vmem:[%s268 + $0x68] sm:$0xff] %v398
        %415 = vst [vmem:[%s268 + $0x70] sm:$0xff] %v399
        %416 = vst [vmem:[%s268 + $0x78] sm:$0xff] %v400
        %s417 = sand.u32 %s109, 1
        %s418 = scalar_lea.sflag [#allocation4], %s417
        %s419 = sand.u32 %s109, 1
        %s420 = smul.addr %s419, 128
        %s421 = scalar_lea.vmem [#allocation8], %s420
        // Predicated region
        $region45: #{tpu_custom_call.1} parent=31 // pred_check
          %p422 = pneg %p119
        $region46: #{tpu_custom_call.1} parent=31 // pred_check_branch
          %424 = sbr.rel (%p422) target = $region48
        $region47: #{tpu_custom_call.1} parent=31 // pred_region
          %s425 = smul.u32 2, %s23
          %s427 = ssub.s32 2048, 2048
          %428 = vsyncadd %s418, %s427
          %s429 = smul.addr %s425, 8
          %s430 = smul.addr %s429, 128
          %s431 = scalar_lea.hbm %s3, %s430
          %s432 = sshll.u32 %s421, 4
          %s433 = int_to_ptr.vmem [resolvable:$true] %s432
          %438 = dma.vmem_to_hbm [thread:$0]  %s433, 2048, %s431, %s418, 1024, 1024, 64
        $region48: #{tpu_custom_call.1} parent=31 // pred_fallthru
          _
      $region32: #{tpu_custom_call.1} parent=5 // pred_fallthru
        _
      %p439 = scmp.le.s32.totalorder 2, %s18
      // Predicated region
      $region49: #{tpu_custom_call.1} parent=5 // pred_check
        %p440 = pneg %p439
      $region50: #{tpu_custom_call.1} parent=5 // pred_check_branch
        %442 = sbr.rel (%p440) target = $region52
      $region51: #{tpu_custom_call.1} parent=5 // pred_region
        %s443 = ssub.s32 %s18, 2
        // Predicated region
        $region53: #{tpu_custom_call.1} parent=51 // pred_check
          %p444 = pneg %p125
        $region54: #{tpu_custom_call.1} parent=51 // pred_check_branch
          %446 = sbr.rel (%p444) target = $region56
        $region55: #{tpu_custom_call.1} parent=51 // pred_region
          %s447 = sand.u32 %s110, 1
          %s448 = scalar_lea.sflag [#allocation4], %s447
          %s449 = sand.u32 %s110, 1
          %s450 = smul.addr %s449, 128
          %s451 = scalar_lea.vmem [#allocation8], %s450
          %452 = dma.done %s448, 2048
        $region56: #{tpu_custom_call.1} parent=51 // pred_fallthru
          _
      $region52: #{tpu_custom_call.1} parent=5 // pred_fallthru
        _
    $region6: #{tpu_custom_call.1} parent=1 // loop_footer
      %s22 = sadd.s32 1, %s18
    $region7: #{tpu_custom_call.1} parent=1 // loop_footer_branch
      %17 = sbr.rel target = $region3
    $region8: #{tpu_custom_call.1} parent=1 // loop_exit
      _
    %453 = vsyncpa [#allocation3], 1
    %s454 = scalar_lea.sflag [#allocation3], 1
    %455 = vsyncpa %s454, 1
    %456 = vsyncpa [#allocation6], 1
    %s457 = scalar_lea.sflag [#allocation6], 1
    %458 = vsyncpa %s457, 1
    %459 = vsyncpa [#allocation4], 1
    %s460 = scalar_lea.sflag [#allocation4], 1
    %461 = vsyncpa %s460, 1

</llo_original>
